<compile_context>
chip_gen: v5e
topology: v5e:2x2
jax: 0.10.0
libtpu: 0.0.40
codegen_flags: <defaults>
</compile_context>

<pallas_src>
import jax
import jax.numpy as jnp
from jax.experimental import pallas as pl
from jax.experimental.pallas import tpu as pltpu

DIM = 128        # feature dimension (MoCo default 128) -> lane-dense layouts
K_QUEUE = 256    # queue size (MoCo default 65536, shrunk; K % batch == 0 holds)
M_MOM = 0.999    # momentum of the key-encoder update
TEMP = 0.07      # softmax temperature

BLOCK_N = 128    # encoder batch tile (clamped to N); multiple of 8 sublanes
BLOCK_K = 4096   # queue-row tile for l_neg (clamped to K); multiple of 128
BLOCK_ROWS = 4096  # momentum-update row tile over (rows, 128) param views


def _vmem_limit(tile_bytes):
    """Scoped-VMEM budget from the actual tile footprint.

    Clamped to 64 MiB so one formula is safe on v7x (64 MiB physical) as well
    as v5e/v6e (128 MiB); floor of 32 MiB so small demo tiles never regress
    below the default scoped limit.
    """
    return int(min(max(tile_bytes + (8 << 20), 32 << 20), 64 << 20))


# ----------------------------------------------------------------------------
# Encoder: fused global-average-pool + fc + F.normalize(dim=1)
# ----------------------------------------------------------------------------
def _encoder_kernel(x_ref, w_ref, b_ref, out_ref):
    """x_ref: (tn, C*HW) f32; w_ref: (C*HW, DIM) bf16 (1/HW folded in, rows
    replicated over HW); b_ref: (1, DIM) f32; out_ref: (tn, DIM) bf16.

    pool + fc is a single MXU matmul (bf16 operands, f32 accumulation); the
    only VPU/XLU work left is the tiny (tn, 128) normalize.
    """
    xb = x_ref[...].astype(jnp.bfloat16)
    feat = jnp.dot(xb, w_ref[...], preferred_element_type=jnp.float32)
    feat = feat + b_ref[...]
    # F.normalize(dim=1): x * rsqrt(max(||x||^2, eps^2))  (EUP rsqrt, not a
    # VPU divide); eps^2 = 1e-24 matches torch's max(||x||, 1e-12) clamp.
    sq = jnp.sum(feat * feat, axis=1, keepdims=True)
    inv = jax.lax.rsqrt(jnp.maximum(sq, 1e-24))
    out_ref[...] = (feat * inv).astype(out_ref.dtype)


def make_fused_fc_weight(w, hw):
    """Fold the 1/(H*W) of the global-avg-pool into the fc weight and replicate
    it over the spatial axis so pool+fc become one MXU matmul.

    TODO(synk): in a training loop cache this (bf16) fused weight for the query
    encoder across steps instead of recomputing it per call.
    """
    return jnp.repeat(w * (1.0 / hw), hw, axis=0).astype(jnp.bfloat16)


def encoder_forward(x_nchw, w_fused, b, block_n=BLOCK_N):
    N, C, H, W = x_nchw.shape
    CHW = C * H * W
    x = x_nchw.reshape(N, CHW)
    tn = min(block_n, N)
    assert N % tn == 0 and tn % 8 == 0
    tile_bytes = (2 * (tn * CHW * 4)      # x tile, f32, double-buffered
                  + 2 * (CHW * DIM * 2)   # fused weight, bf16
                  + 2 * (DIM * 4)         # bias
                  + 2 * (tn * DIM * 2))   # output tile, bf16
    return pl.pallas_call(
        _encoder_kernel,
        out_shape=jax.ShapeDtypeStruct((N, DIM), jnp.bfloat16),
        grid=(N // tn,),
        in_specs=[
            pl.BlockSpec((tn, CHW), lambda i: (i, 0)),
            pl.BlockSpec((CHW, DIM), lambda i: (0, 0)),
            pl.BlockSpec((1, DIM), lambda i: (0, 0)),
        ],
        out_specs=pl.BlockSpec((tn, DIM), lambda i: (i, 0)),
        compiler_params=pltpu.CompilerParams(
            dimension_semantics=("parallel",),
            vmem_limit_bytes=_vmem_limit(tile_bytes)),
    )(x, w_fused, b)


# ----------------------------------------------------------------------------
# Fused contrastive logits: l_neg tiles over the queue + l_pos in one call
# ----------------------------------------------------------------------------
def _logits_kernel(q_ref, k_ref, queue_ref, lneg_ref, lpos_ref):
    """q_ref/k_ref: (N, DIM) bf16; queue_ref: (tk, DIM) bf16 rows;
    lneg_ref: (N, tk) f32; lpos_ref: (N, 1) f32 (written on the first step).

    1/TEMP is applied to the small (N, DIM) q operand (tk/128-fold fewer VPU
    multiplies than scaling the output tile); queue is contracted on its
    feature axis so no transpose is materialized; f32 MXU accumulation.
    """
    q32 = q_ref[...].astype(jnp.float32) * (1.0 / TEMP)
    qb = q32.astype(jnp.bfloat16)
    lneg_ref[...] = jax.lax.dot_general(
        qb, queue_ref[...], (((1,), (1,)), ((), ())),
        preferred_element_type=jnp.float32)

    @pl.when(pl.program_id(0) == 0)
    def _():
        lpos_ref[...] = jnp.sum(q32 * k_ref[...].astype(jnp.float32),
                                axis=1, keepdims=True)


def contrastive_logits(q, k, queue_rows, block_k=BLOCK_K):
    N, D = q.shape
    K = queue_rows.shape[0]
    tk = min(block_k, K)
    assert K % tk == 0 and tk % 128 == 0
    tile_bytes = (2 * 2 * (N * D * 2)     # q and k blocks, bf16
                  + 2 * (tk * D * 2)      # queue tile, bf16
                  + 2 * (N * tk * 4)      # l_neg tile, f32
                  + 2 * (N * 4))          # l_pos block
    l_neg, l_pos = pl.pallas_call(
        _logits_kernel,
        out_shape=(jax.ShapeDtypeStruct((N, K), jnp.float32),
                   jax.ShapeDtypeStruct((N, 1), jnp.float32)),
        grid=(K // tk,),
        in_specs=[
            pl.BlockSpec((N, D), lambda j: (0, 0)),     # q (resident)
            pl.BlockSpec((N, D), lambda j: (0, 0)),     # k (resident)
            pl.BlockSpec((tk, D), lambda j: (j, 0)),    # queue row tile
        ],
        out_specs=[
            pl.BlockSpec((N, tk), lambda j: (0, j)),    # lane-dense l_neg
            pl.BlockSpec((N, 1), lambda j: (0, 0)),     # l_pos (revisited)
        ],
        compiler_params=pltpu.CompilerParams(
            # l_pos block is revisited across the queue axis (written once on
            # step 0), so keep this axis "arbitrary"; measured delta vs
            # "parallel" is ~0 anyway.
            dimension_semantics=("arbitrary",),
            vmem_limit_bytes=_vmem_limit(tile_bytes)),
    )(q, k, queue_rows)
    return l_pos, l_neg


# ----------------------------------------------------------------------------
# Momentum update: param_k = m * param_k + (1 - m) * param_q  (tiled, aliased)
# ----------------------------------------------------------------------------
def _momentum_kernel(pq_ref, pk_ref, out_ref):
    out_ref[...] = pk_ref[...] * M_MOM + pq_ref[...] * (1.0 - M_MOM)


def momentum_update_param(p_q, p_k, block_rows=BLOCK_ROWS):
    """Generic, tiled, HBM-aliased momentum FMA over a lane-dense (rows, 128)
    view of one parameter. Pure memory bandwidth; 'parallel' grid lets v7x's
    two TensorCores split the stream at ResNet-scale parameter counts."""
    assert p_q.shape == p_k.shape and p_q.dtype == p_k.dtype
    orig_shape = p_q.shape
    size = p_q.size
    assert size % 128 == 0, "params must flatten to a 128-lane-dense view"
    rows = size // 128
    pq2 = p_q.reshape(rows, 128)
    pk2 = p_k.reshape(rows, 128)

    tr = min(rows, block_rows)
    if tr != rows:
        tr -= tr % 8                       # partial tiles need 8-sublane rows
        while tr > 8 and rows % tr:
            tr -= 8
        if tr < 8 or rows % tr:
            tr = rows                      # fall back to one whole-array block

    itemsize = jnp.dtype(p_k.dtype).itemsize
    tile_bytes = 3 * 2 * tr * 128 * itemsize   # 3 blocks, double-buffered
    new_pk = pl.pallas_call(
        _momentum_kernel,
        out_shape=jax.ShapeDtypeStruct((rows, 128), p_k.dtype),
        grid=(rows // tr,),
        in_specs=[
            pl.BlockSpec((tr, 128), lambda i: (i, 0)),
            pl.BlockSpec((tr, 128), lambda i: (i, 0)),
        ],
        out_specs=pl.BlockSpec((tr, 128), lambda i: (i, 0)),
        input_output_aliases={1: 0},       # in-place update of param_k in HBM
        compiler_params=pltpu.CompilerParams(
            dimension_semantics=("parallel",),
            vmem_limit_bytes=_vmem_limit(tile_bytes)),
    )(pq2, pk2)
    return new_pk.reshape(orig_shape)


# ----------------------------------------------------------------------------
# Queue enqueue: queue[ptr:ptr+N, :] = keys  (HBM->HBM DMA, in place)
# ----------------------------------------------------------------------------
def _enqueue_kernel(ptr_ref, k_ref, queue_in_ref, queue_out_ref, sem):
    """Keys stay in HBM (pl.ANY) and are copied straight into the aliased queue
    rows: one HBM->HBM DMA of N contiguous (DIM,) bf16 rows, nothing staged
    through VMEM and nothing else in the queue touched."""
    del queue_in_ref  # same HBM buffer as queue_out_ref (aliased)
    n = k_ref.shape[0]
    # ptr starts at 0, always advances by the batch size, and K % n == 0
    # (asserted in the wrapper), so ptr is a true multiple of n.
    start = pl.multiple_of(ptr_ref[0], n)
    cp = pltpu.make_async_copy(k_ref, queue_out_ref.at[pl.ds(start, n), :], sem)
    cp.start()
    cp.wait()


def dequeue_and_enqueue(queue_rows, queue_ptr, k):
    K, D = queue_rows.shape
    n = k.shape[0]
    assert K % n == 0                      # same invariant as the PyTorch assert
    assert k.dtype == queue_rows.dtype and k.shape[1] == D
    new_queue = pl.pallas_call(
        _enqueue_kernel,
        out_shape=jax.ShapeDtypeStruct(queue_rows.shape, queue_rows.dtype),
        in_specs=[
            pl.BlockSpec(memory_space=pltpu.MemorySpace.SMEM),  # ptr (1,) i32
            pl.BlockSpec(memory_space=pl.ANY),                  # keys in HBM
            pl.BlockSpec(memory_space=pl.ANY),                  # queue (aliased)
        ],
        out_specs=pl.BlockSpec(memory_space=pl.ANY),
        scratch_shapes=[pltpu.SemaphoreType.DMA],
        input_output_aliases={2: 0},
        compiler_params=pltpu.CompilerParams(has_side_effects=True),
    )(queue_ptr, k, queue_rows)
    new_ptr = ((queue_ptr + n) % K).astype(jnp.int32)
    return new_queue, new_ptr


# ----------------------------------------------------------------------------
# MoCo forward (JAX glue around the Pallas kernels)
# ----------------------------------------------------------------------------
def moco_forward(params, state, im_q, im_k):
    w_q, b_q = params["w_q"], params["b_q"]
    w_k, b_k = params["w_k"], params["b_k"]
    queue_rows, queue_ptr = state["queue"], state["queue_ptr"]  # (K, DIM) bf16

    N, C, H, W = im_q.shape
    HW = H * W

    # q = normalize(encoder_q(im_q)) -- pool+fc fused into one MXU matmul.
    w_fused_q = make_fused_fc_weight(w_q, HW)
    q = encoder_forward(im_q, w_fused_q, b_q)

    # momentum update of the key encoder (tiled, HBM-aliased FMA per param).
    w_k = momentum_update_param(w_q, w_k)
    b_k = momentum_update_param(b_q, b_k)

    # TODO(synk): torch.distributed all_gather / broadcast (DDP batch shuffle)
    # have no single-chip equivalent; with world_size == 1 and a per-sample
    # (BN-free) encoder the shuffle/unshuffle is the identity, so it is dropped.
    w_fused_k = make_fused_fc_weight(w_k, HW)
    k = encoder_forward(im_k, w_fused_k, b_k)   # normalize(encoder_k(im_k))

    # fused logits: one pallas_call emits lane-dense l_neg (N, K) queue tiles
    # and l_pos (N, 1); 1/T is already folded in (applied to the q operand).
    l_pos, l_neg = contrastive_logits(q, k, queue_rows)
    # TODO(synk): in a training loop feed (l_pos, l_neg) split into the CE loss
    # (labels are all zero) instead of materializing this never-128-aligned
    # 1+K concat; it is kept only to match the PyTorch return shape.
    logits = jnp.concatenate([l_pos, l_neg], axis=1)
    labels = jnp.zeros((q.shape[0],), dtype=jnp.int32)

    # dequeue & enqueue: queue_rows[ptr:ptr+N, :] = k  (row-contiguous, in place)
    new_queue, new_ptr = dequeue_and_enqueue(queue_rows, queue_ptr, k)

    new_params = {"w_q": w_q, "b_q": b_q, "w_k": w_k, "b_k": b_k}
    new_state = {"queue": new_queue, "queue_ptr": new_ptr}
    return (logits, labels), new_params, new_state


# ----------------------------------------------------------------------------
# Deterministic parameter init + driver
# ----------------------------------------------------------------------------
if __name__ == "__main__":
    N, C, H, W = 16, 4, 16, 16   # small demo shapes (K_QUEUE % N == 0 holds)

    key = jax.random.PRNGKey(0)
    k_wq, k_q1, k_q2, k_queue = jax.random.split(key, 4)

    # query-encoder fc params; key encoder starts as an exact copy (as in __init__)
    w_q = 0.02 * jax.random.normal(k_wq, (C, DIM), dtype=jnp.float32)
    b_q = jnp.zeros((1, DIM), dtype=jnp.float32)
    params = {"w_q": w_q, "b_q": b_q, "w_k": w_q + 0.0, "b_k": b_q + 0.0}

    # queue buffer: randn(dim, K), normalized along dim=0; stored row-major
    # (K, dim) in bf16 (halves the memory-bound l_neg stream).
    queue_t = jax.random.normal(k_queue, (DIM, K_QUEUE), dtype=jnp.float32)
    queue_t = queue_t / jnp.maximum(
        jnp.sqrt(jnp.sum(queue_t * queue_t, axis=0, keepdims=True)), 1e-12)
    state = {"queue": jnp.asarray(queue_t.T, dtype=jnp.bfloat16),
             "queue_ptr": jnp.zeros((1,), dtype=jnp.int32)}

    im_q = jax.random.normal(k_q1, (N, C, H, W), dtype=jnp.float32)
    im_k = jax.random.normal(k_q2, (N, C, H, W), dtype=jnp.float32)

    (logits, labels), new_params, new_state = moco_forward(
        params, state, im_q, im_k)

    jax.block_until_ready((logits, labels, new_state["queue"],
                           new_state["queue_ptr"]))
    assert logits.shape == (N, 1 + K_QUEUE)
    assert labels.shape == (N,)
    assert new_state["queue"].shape == (K_QUEUE, DIM)
    assert new_state["queue"].dtype == jnp.bfloat16
    print("KERNEL_OK")
</pallas_src>

<mosaic_0001>
module attributes {stable_mosaic.version = 11 : i64} {
  func.func @_encoder_kernel(%arg0: i32, %arg1: memref<16x1024xf32, #tpu.memory_space<vmem>>, %arg2: memref<1024x128xbf16, #tpu.memory_space<vmem>>, %arg3: memref<1x128xf32, #tpu.memory_space<vmem>>, %arg4: memref<16x128xbf16, #tpu.memory_space<vmem>>) attributes {dimension_semantics = [#tpu.dimension_semantics<parallel>], iteration_bounds = array<i64: 1>, scalar_prefetch = 0 : i64, scratch_operands = 0 : i64, tpu.core_type = #tpu.core_type<tc>, window_params = [{transform_indices = @transform_0, window_bounds = array<i64: 16, 1024>}, {pipeline_mode = #tpu.pipeline_mode<synchronous>, transform_indices = @transform_1, window_bounds = array<i64: 1024, 128>}, {pipeline_mode = #tpu.pipeline_mode<synchronous>, transform_indices = @transform_2, window_bounds = array<i64: 1, 128>}, {transform_indices = @transform_3, window_bounds = array<i64: 16, 128>}]} {
    %c0 = arith.constant 0 : index
    %c0_0 = arith.constant 0 : index
    %0 = vector.load %arg1[%c0, %c0_0] : memref<16x1024xf32, #tpu.memory_space<vmem>>, vector<16x1024xf32>
    %1 = arith.truncf %0 : vector<16x1024xf32> to vector<16x1024xbf16>
    %c0_1 = arith.constant 0 : index
    %c0_2 = arith.constant 0 : index
    %2 = vector.load %arg2[%c0_1, %c0_2] : memref<1024x128xbf16, #tpu.memory_space<vmem>>, vector<1024x128xbf16>
    %cst = arith.constant dense<0.000000e+00> : vector<16x128xf32>
    %3 = tpu.matmul %1, %2, %cst {dimension_numbers = #tpu.dot_dimension_numbers<[1], [0], [0], [1], [0, 0, 1, 1], [], []>} : vector<16x1024xbf16>, vector<1024x128xbf16>, vector<16x128xf32> -> vector<16x128xf32>
    %c0_3 = arith.constant 0 : index
    %c0_4 = arith.constant 0 : index
    %4 = vector.load %arg3[%c0_3, %c0_4] : memref<1x128xf32, #tpu.memory_space<vmem>>, vector<1x128xf32>
    %5 = vector.broadcast %4 : vector<1x128xf32> to vector<16x128xf32>
    %6 = arith.addf %3, %5 : vector<16x128xf32>
    %7 = arith.mulf %6, %6 : vector<16x128xf32>
    %cst_5 = arith.constant dense<0.000000e+00> : vector<16xf32>
    %8 = vector.multi_reduction <add>, %7, %cst_5 [1] : vector<16x128xf32> to vector<16xf32>
    %9 = vector.shape_cast %8 : vector<16xf32> to vector<16x1xf32>
    %cst_6 = arith.constant 1.000000e-24 : f32
    %10 = vector.broadcast %cst_6 : f32 to vector<16x1xf32>
    %11 = arith.maximumf %9, %10 : vector<16x1xf32>
    %12 = math.rsqrt %11 : vector<16x1xf32>
    %13 = vector.broadcast %12 : vector<16x1xf32> to vector<16x128xf32>
    %14 = arith.mulf %6, %13 : vector<16x128xf32>
    %15 = arith.truncf %14 : vector<16x128xf32> to vector<16x128xbf16>
    %c0_7 = arith.constant 0 : index
    %c0_8 = arith.constant 0 : index
    %16 = vector.load %arg4[%c0_7, %c0_8] : memref<16x128xbf16, #tpu.memory_space<vmem>>, vector<16x128xbf16>
    tpu.vector_store %arg4[%c0_7, %c0_8], %15 {strides = array<i32>} : memref<16x128xbf16, #tpu.memory_space<vmem>>, vector<16x128xbf16>,
    return
  }
  func.func @transform_0(%arg0: i32) -> (i32, i32) {
    %c0_i32 = arith.constant 0 : i32
    %c0_i32_0 = arith.constant 0 : i32
    return %arg0, %c0_i32 : i32, i32
  }
  func.func @transform_1(%arg0: i32) -> (i32, i32) {
    %c0_i32 = arith.constant 0 : i32
    %c0_i32_0 = arith.constant 0 : i32
    %c0_i32_1 = arith.constant 0 : i32
    return %c0_i32, %c0_i32_0 : i32, i32
  }
  func.func @transform_2(%arg0: i32) -> (i32, i32) {
    %c0_i32 = arith.constant 0 : i32
    %c0_i32_0 = arith.constant 0 : i32
    %c0_i32_1 = arith.constant 0 : i32
    return %c0_i32, %c0_i32_0 : i32, i32
  }
  func.func @transform_3(%arg0: i32) -> (i32, i32) {
    %c0_i32 = arith.constant 0 : i32
    %c0_i32_0 = arith.constant 0 : i32
    return %arg0, %c0_i32 : i32, i32
  }
}

</mosaic_0001>

<llo_original>
// kernel: tpu_custom_call.1
$region0: #{tpu_custom_call.1}
  #allocation0 [shape = 'u32[]', space=smem, size = 0x4, offset = 0x4, fixed_abs, tag = 'smem constant byte address 0x4 - core index']
  #allocation1 [shape = 'u32[72,128]{1,0:T(1,128)}', space=vmem, size = 0x9000, scoped, tag = 'internal scratch']
  %s0 = inlined_call_operand.hbm [shape: f32[16,1024], index: 0, kind: input, shape index: {}]
  %s1 = inlined_call_operand.hbm [shape: bf16[1024,128], index: 1, kind: input, shape index: {}]
  %s2 = inlined_call_operand.vmem [shape: f32[1,128], index: 2, kind: input, shape index: {}]
  %s3 = inlined_call_operand.hbm [shape: bf16[16,128], index: 3, kind: output, shape index: {}]
  %s4 = sld [smem:[#allocation0]]
  $region30: #{tpu_custom_call.1} parent=0
    _
  %s6 = ssub.s32 1, %s4
  %s7 = scalar_select 0, %s6, %s4
  $region1: #{tpu_custom_call.1} parent=0
    #allocation2 [shape = 'u8[65536]{0}', space=vmem, size = 0x10000, scoped, tag = 'input window, operand 0, single buffered']
    #allocation3 [shape = 's32[1]{0}', space=sflag, size = 0x4, scoped, tag = 'scoped memory for tpu_custom_call.1']
    #allocation4 [shape = 's32[1]{0}', space=sflag, size = 0x4, scoped, tag = 'scoped memory for tpu_custom_call.1']
    #allocation5 [shape = 'u8[262144]{0}', space=vmem, size = 0x40000, scoped, tag = 'input window, operand 1, single buffered']
    #allocation6 [shape = 's32[1]{0}', space=sflag, size = 0x4, scoped, tag = 'scoped memory for tpu_custom_call.1']
    #allocation7 [shape = 'u8[4096]{0}', space=vmem, size = 0x1000, scoped, tag = 'output window, operand 0, single buffered']
    %8 = vsyncpa [#allocation3], 0
    %9 = vsyncpa [#allocation6], 0
    %10 = vsyncpa [#allocation4], 0
    // Predicated region
    $region2: #{tpu_custom_call.1} parent=1 // pred_check
      _
    $region3: #{tpu_custom_call.1} parent=1 // pred_check_branch
      %12 = sbr.rel (0) target = $region5
    $region4: #{tpu_custom_call.1} parent=1 // pred_region
      %14 = vsyncadd [#allocation3], 0
      %s15 = sshll.u32 %s0, 4
      %s16 = int_to_ptr.hbm [resolvable:$true] %s15
      %s17 = sshll.u32 [#allocation2], 4
      %s18 = int_to_ptr.vmem [resolvable:$true] %s17
      %23 = dma.hbm_to_vmem [thread:$0]  %s16, 2048, %s18, [#allocation3], 1024, 1024, 64
    $region5: #{tpu_custom_call.1} parent=1 // pred_fallthru
      _
    // Predicated region
    $region6: #{tpu_custom_call.1} parent=1 // pred_check
      _
    $region7: #{tpu_custom_call.1} parent=1 // pred_check_branch
      %25 = sbr.rel (0) target = $region9
    $region8: #{tpu_custom_call.1} parent=1 // pred_region
      %27 = vsyncadd [#allocation6], 0
      %s28 = sshll.u32 %s1, 4
      %s29 = int_to_ptr.hbm [resolvable:$true] %s28
      %s30 = sshll.u32 [#allocation5], 4
      %s31 = int_to_ptr.vmem [resolvable:$true] %s30
      %36 = dma.hbm_to_vmem [thread:$0]  %s29, 8192, %s31, [#allocation6], 64, 64, 4
    $region9: #{tpu_custom_call.1} parent=1 // pred_fallthru
      _
    // Predicated region
    $region10: #{tpu_custom_call.1} parent=1 // pred_check
      _
    $region11: #{tpu_custom_call.1} parent=1 // pred_check_branch
      %38 = sbr.rel (0) target = $region13
    $region12: #{tpu_custom_call.1} parent=1 // pred_region
      _
    $region13: #{tpu_custom_call.1} parent=1 // pred_fallthru
      _
    // Predicated region
    $region14: #{tpu_custom_call.1} parent=1 // pred_check
      _
    $region15: #{tpu_custom_call.1} parent=1 // pred_check_branch
      %40 = sbr.rel (0) target = $region17
    $region16: #{tpu_custom_call.1} parent=1 // pred_region
      %42 = dma.done [#allocation3], 2048
    $region17: #{tpu_custom_call.1} parent=1 // pred_fallthru
      _
    // Predicated region
    $region18: #{tpu_custom_call.1} parent=1 // pred_check
      _
    $region19: #{tpu_custom_call.1} parent=1 // pred_check_branch
      %44 = sbr.rel (0) target = $region21
    $region20: #{tpu_custom_call.1} parent=1 // pred_region
      %46 = dma.done [#allocation6], 8192
    $region21: #{tpu_custom_call.1} parent=1 // pred_fallthru
      _
    %v47 = vld [vmem:[#allocation2] sm:$0xff]
    %v48 = vld [vmem:[#allocation2 + $0x8] sm:$0xff]
    %v49 = vld [vmem:[#allocation2 + $0x10] sm:$0xff]
    %v50 = vld [vmem:[#allocation2 + $0x18] sm:$0xff]
    %v51 = vld [vmem:[#allocation2 + $0x20] sm:$0xff]
    %v52 = vld [vmem:[#allocation2 + $0x28] sm:$0xff]
    %v53 = vld [vmem:[#allocation2 + $0x30] sm:$0xff]
    %v54 = vld [vmem:[#allocation2 + $0x38] sm:$0xff]
    %v55 = vld [vmem:[#allocation2 + $0x40] sm:$0xff]
    %v56 = vld [vmem:[#allocation2 + $0x48] sm:$0xff]
    %v57 = vld [vmem:[#allocation2 + $0x50] sm:$0xff]
    %v58 = vld [vmem:[#allocation2 + $0x58] sm:$0xff]
    %v59 = vld [vmem:[#allocation2 + $0x60] sm:$0xff]
    %v60 = vld [vmem:[#allocation2 + $0x68] sm:$0xff]
    %v61 = vld [vmem:[#allocation2 + $0x70] sm:$0xff]
    %v62 = vld [vmem:[#allocation2 + $0x78] sm:$0xff]
    %v63 = vpack.c.bf16 %v55, %v47
    %v64 = vpack.c.bf16 %v56, %v48
    %v65 = vpack.c.bf16 %v57, %v49
    %v66 = vpack.c.bf16 %v58, %v50
    %v67 = vpack.c.bf16 %v59, %v51
    %v68 = vpack.c.bf16 %v60, %v52
    %v69 = vpack.c.bf16 %v61, %v53
    %v70 = vpack.c.bf16 %v62, %v54
    %v71 = vld [vmem:[#allocation5] sm:$0xf]
    %v72 = vld [vmem:[#allocation5 + $0x4] sm:$0xf]
    %v73 = vld [vmem:[#allocation5 + $0x8] sm:$0xf]
    %v74 = vld [vmem:[#allocation5 + $0xc] sm:$0xf]
    %v75 = vld [vmem:[#allocation5 + $0x10] sm:$0xf]
    %v76 = vld [vmem:[#allocation5 + $0x14] sm:$0xf]
    %v77 = vld [vmem:[#allocation5 + $0x18] sm:$0xf]
    %v78 = vld [vmem:[#allocation5 + $0x1c] sm:$0xf]
    %v79 = vld [vmem:[#allocation5 + $0x20] sm:$0xf]
    %v80 = vld [vmem:[#allocation5 + $0x24] sm:$0xf]
    %v81 = vld [vmem:[#allocation5 + $0x28] sm:$0xf]
    %v82 = vld [vmem:[#allocation5 + $0x2c] sm:$0xf]
    %v83 = vld [vmem:[#allocation5 + $0x30] sm:$0xf]
    %v84 = vld [vmem:[#allocation5 + $0x34] sm:$0xf]
    %v85 = vld [vmem:[#allocation5 + $0x38] sm:$0xf]
    %v86 = vld [vmem:[#allocation5 + $0x3c] sm:$0xf]
    %v87 = vld [vmem:[#allocation5 + $0x40] sm:$0xf]
    %v88 = vld [vmem:[#allocation5 + $0x44] sm:$0xf]
    %v89 = vld [vmem:[#allocation5 + $0x48] sm:$0xf]
    %v90 = vld [vmem:[#allocation5 + $0x4c] sm:$0xf]
    %v91 = vld [vmem:[#allocation5 + $0x50] sm:$0xf]
    %v92 = vld [vmem:[#allocation5 + $0x54] sm:$0xf]
    %v93 = vld [vmem:[#allocation5 + $0x58] sm:$0xf]
    %v94 = vld [vmem:[#allocation5 + $0x5c] sm:$0xf]
    %v95 = vld [vmem:[#allocation5 + $0x60] sm:$0xf]
    %v96 = vld [vmem:[#allocation5 + $0x64] sm:$0xf]
    %v97 = vld [vmem:[#allocation5 + $0x68] sm:$0xf]
    %v98 = vld [vmem:[#allocation5 + $0x6c] sm:$0xf]
    %v99 = vld [vmem:[#allocation5 + $0x70] sm:$0xf]
    %v100 = vld [vmem:[#allocation5 + $0x74] sm:$0xf]
    %v101 = vld [vmem:[#allocation5 + $0x78] sm:$0xf]
    %v102 = vld [vmem:[#allocation5 + $0x7c] sm:$0xf]
    %v103 = vld [vmem:[#allocation5 + $0x80] sm:$0xf]
    %v104 = vld [vmem:[#allocation5 + $0x84] sm:$0xf]
    %v105 = vld [vmem:[#allocation5 + $0x88] sm:$0xf]
    %v106 = vld [vmem:[#allocation5 + $0x8c] sm:$0xf]
    %v107 = vld [vmem:[#allocation5 + $0x90] sm:$0xf]
    %v108 = vld [vmem:[#allocation5 + $0x94] sm:$0xf]
    %v109 = vld [vmem:[#allocation5 + $0x98] sm:$0xf]
    %v110 = vld [vmem:[#allocation5 + $0x9c] sm:$0xf]
    %v111 = vld [vmem:[#allocation5 + $0xa0] sm:$0xf]
    %v112 = vld [vmem:[#allocation5 + $0xa4] sm:$0xf]
    %v113 = vld [vmem:[#allocation5 + $0xa8] sm:$0xf]
    %v114 = vld [vmem:[#allocation5 + $0xac] sm:$0xf]
    %v115 = vld [vmem:[#allocation5 + $0xb0] sm:$0xf]
    %v116 = vld [vmem:[#allocation5 + $0xb4] sm:$0xf]
    %v117 = vld [vmem:[#allocation5 + $0xb8] sm:$0xf]
    %v118 = vld [vmem:[#allocation5 + $0xbc] sm:$0xf]
    %v119 = vld [vmem:[#allocation5 + $0xc0] sm:$0xf]
    %v120 = vld [vmem:[#allocation5 + $0xc4] sm:$0xf]
    %v121 = vld [vmem:[#allocation5 + $0xc8] sm:$0xf]
    %v122 = vld [vmem:[#allocation5 + $0xcc] sm:$0xf]
    %v123 = vld [vmem:[#allocation5 + $0xd0] sm:$0xf]
    %v124 = vld [vmem:[#allocation5 + $0xd4] sm:$0xf]
    %v125 = vld [vmem:[#allocation5 + $0xd8] sm:$0xf]
    %v126 = vld [vmem:[#allocation5 + $0xdc] sm:$0xf]
    %v127 = vld [vmem:[#allocation5 + $0xe0] sm:$0xf]
    %v128 = vld [vmem:[#allocation5 + $0xe4] sm:$0xf]
    %v129 = vld [vmem:[#allocation5 + $0xe8] sm:$0xf]
    %v130 = vld [vmem:[#allocation5 + $0xec] sm:$0xf]
    %v131 = vld [vmem:[#allocation5 + $0xf0] sm:$0xf]
    %v132 = vld [vmem:[#allocation5 + $0xf4] sm:$0xf]
    %v133 = vld [vmem:[#allocation5 + $0xf8] sm:$0xf]
    %v134 = vld [vmem:[#allocation5 + $0xfc] sm:$0xf]
    %v135 = vld [vmem:[#allocation5 + $0x100] sm:$0xf]
    %v136 = vld [vmem:[#allocation5 + $0x104] sm:$0xf]
    %v137 = vld [vmem:[#allocation5 + $0x108] sm:$0xf]
    %v138 = vld [vmem:[#allocation5 + $0x10c] sm:$0xf]
    %v139 = vld [vmem:[#allocation5 + $0x110] sm:$0xf]
    %v140 = vld [vmem:[#allocation5 + $0x114] sm:$0xf]
    %v141 = vld [vmem:[#allocation5 + $0x118] sm:$0xf]
    %v142 = vld [vmem:[#allocation5 + $0x11c] sm:$0xf]
    %v143 = vld [vmem:[#allocation5 + $0x120] sm:$0xf]
    %v144 = vld [vmem:[#allocation5 + $0x124] sm:$0xf]
    %v145 = vld [vmem:[#allocation5 + $0x128] sm:$0xf]
    %v146 = vld [vmem:[#allocation5 + $0x12c] sm:$0xf]
    %v147 = vld [vmem:[#allocation5 + $0x130] sm:$0xf]
    %v148 = vld [vmem:[#allocation5 + $0x134] sm:$0xf]
    %v149 = vld [vmem:[#allocation5 + $0x138] sm:$0xf]
    %v150 = vld [vmem:[#allocation5 + $0x13c] sm:$0xf]
    %v151 = vld [vmem:[#allocation5 + $0x140] sm:$0xf]
    %v152 = vld [vmem:[#allocation5 + $0x144] sm:$0xf]
    %v153 = vld [vmem:[#allocation5 + $0x148] sm:$0xf]
    %v154 = vld [vmem:[#allocation5 + $0x14c] sm:$0xf]
    %v155 = vld [vmem:[#allocation5 + $0x150] sm:$0xf]
    %v156 = vld [vmem:[#allocation5 + $0x154] sm:$0xf]
    %v157 = vld [vmem:[#allocation5 + $0x158] sm:$0xf]
    %v158 = vld [vmem:[#allocation5 + $0x15c] sm:$0xf]
    %v159 = vld [vmem:[#allocation5 + $0x160] sm:$0xf]
    %v160 = vld [vmem:[#allocation5 + $0x164] sm:$0xf]
    %v161 = vld [vmem:[#allocation5 + $0x168] sm:$0xf]
    %v162 = vld [vmem:[#allocation5 + $0x16c] sm:$0xf]
    %v163 = vld [vmem:[#allocation5 + $0x170] sm:$0xf]
    %v164 = vld [vmem:[#allocation5 + $0x174] sm:$0xf]
    %v165 = vld [vmem:[#allocation5 + $0x178] sm:$0xf]
    %v166 = vld [vmem:[#allocation5 + $0x17c] sm:$0xf]
    %v167 = vld [vmem:[#allocation5 + $0x180] sm:$0xf]
    %v168 = vld [vmem:[#allocation5 + $0x184] sm:$0xf]
    %v169 = vld [vmem:[#allocation5 + $0x188] sm:$0xf]
    %v170 = vld [vmem:[#allocation5 + $0x18c] sm:$0xf]
    %v171 = vld [vmem:[#allocation5 + $0x190] sm:$0xf]
    %v172 = vld [vmem:[#allocation5 + $0x194] sm:$0xf]
    %v173 = vld [vmem:[#allocation5 + $0x198] sm:$0xf]
    %v174 = vld [vmem:[#allocation5 + $0x19c] sm:$0xf]
    %v175 = vld [vmem:[#allocation5 + $0x1a0] sm:$0xf]
    %v176 = vld [vmem:[#allocation5 + $0x1a4] sm:$0xf]
    %v177 = vld [vmem:[#allocation5 + $0x1a8] sm:$0xf]
    %v178 = vld [vmem:[#allocation5 + $0x1ac] sm:$0xf]
    %v179 = vld [vmem:[#allocation5 + $0x1b0] sm:$0xf]
    %v180 = vld [vmem:[#allocation5 + $0x1b4] sm:$0xf]
    %v181 = vld [vmem:[#allocation5 + $0x1b8] sm:$0xf]
    %v182 = vld [vmem:[#allocation5 + $0x1bc] sm:$0xf]
    %v183 = vld [vmem:[#allocation5 + $0x1c0] sm:$0xf]
    %v184 = vld [vmem:[#allocation5 + $0x1c4] sm:$0xf]
    %v185 = vld [vmem:[#allocation5 + $0x1c8] sm:$0xf]
    %v186 = vld [vmem:[#allocation5 + $0x1cc] sm:$0xf]
    %v187 = vld [vmem:[#allocation5 + $0x1d0] sm:$0xf]
    %v188 = vld [vmem:[#allocation5 + $0x1d4] sm:$0xf]
    %v189 = vld [vmem:[#allocation5 + $0x1d8] sm:$0xf]
    %v190 = vld [vmem:[#allocation5 + $0x1dc] sm:$0xf]
    %v191 = vld [vmem:[#allocation5 + $0x1e0] sm:$0xf]
    %v192 = vld [vmem:[#allocation5 + $0x1e4] sm:$0xf]
    %v193 = vld [vmem:[#allocation5 + $0x1e8] sm:$0xf]
    %v194 = vld [vmem:[#allocation5 + $0x1ec] sm:$0xf]
    %v195 = vld [vmem:[#allocation5 + $0x1f0] sm:$0xf]
    %v196 = vld [vmem:[#allocation5 + $0x1f4] sm:$0xf]
    %v197 = vld [vmem:[#allocation5 + $0x1f8] sm:$0xf]
    %v198 = vld [vmem:[#allocation5 + $0x1fc] sm:$0xf]
    %v199 = vld [vmem:[%s2] sm:$0x1]
    %v201 = vperm.slane %v199, 0
    %v331 = vunpack.c.l.b16 %v71
    %v332 = vunpack.c.l.b16 %v72
    %v333 = vunpack.c.l.b16 %v73
    %v334 = vunpack.c.l.b16 %v74
    %v335 = vunpack.c.l.b16 %v75
    %v336 = vunpack.c.l.b16 %v76
    %v337 = vunpack.c.l.b16 %v77
    %v338 = vunpack.c.l.b16 %v78
    %v339 = vunpack.c.l.b16 %v79
    %v340 = vunpack.c.l.b16 %v80
    %v341 = vunpack.c.l.b16 %v81
    %v342 = vunpack.c.l.b16 %v82
    %v343 = vunpack.c.l.b16 %v83
    %v344 = vunpack.c.l.b16 %v84
    %v345 = vunpack.c.l.b16 %v85
    %v346 = vunpack.c.l.b16 %v86
    %v347 = vunpack.c.l.b16 %v87
    %v348 = vunpack.c.l.b16 %v88
    %v349 = vunpack.c.l.b16 %v89
    %v350 = vunpack.c.l.b16 %v90
    %v351 = vunpack.c.l.b16 %v91
    %v352 = vunpack.c.l.b16 %v92
    %v353 = vunpack.c.l.b16 %v93
    %v354 = vunpack.c.l.b16 %v94
    %v355 = vunpack.c.l.b16 %v95
    %v356 = vunpack.c.l.b16 %v96
    %v357 = vunpack.c.l.b16 %v97
    %v358 = vunpack.c.l.b16 %v98
    %v359 = vunpack.c.l.b16 %v99
    %v360 = vunpack.c.l.b16 %v100
    %v361 = vunpack.c.l.b16 %v101
    %v362 = vunpack.c.l.b16 %v102
    %v363 = vunpack.c.l.b16 %v103
    %v364 = vunpack.c.l.b16 %v104
    %v365 = vunpack.c.l.b16 %v105
    %v366 = vunpack.c.l.b16 %v106
    %v367 = vunpack.c.l.b16 %v107
    %v368 = vunpack.c.l.b16 %v108
    %v369 = vunpack.c.l.b16 %v109
    %v370 = vunpack.c.l.b16 %v110
    %v371 = vunpack.c.l.b16 %v111
    %v372 = vunpack.c.l.b16 %v112
    %v373 = vunpack.c.l.b16 %v113
    %v374 = vunpack.c.l.b16 %v114
    %v375 = vunpack.c.l.b16 %v115
    %v376 = vunpack.c.l.b16 %v116
    %v377 = vunpack.c.l.b16 %v117
    %v378 = vunpack.c.l.b16 %v118
    %v379 = vunpack.c.l.b16 %v119
    %v380 = vunpack.c.l.b16 %v120
    %v381 = vunpack.c.l.b16 %v121
    %v382 = vunpack.c.l.b16 %v122
    %v383 = vunpack.c.l.b16 %v123
    %v384 = vunpack.c.l.b16 %v124
    %v385 = vunpack.c.l.b16 %v125
    %v386 = vunpack.c.l.b16 %v126
    %v387 = vunpack.c.l.b16 %v127
    %v388 = vunpack.c.l.b16 %v128
    %v389 = vunpack.c.l.b16 %v129
    %v390 = vunpack.c.l.b16 %v130
    %v391 = vunpack.c.l.b16 %v131
    %v392 = vunpack.c.l.b16 %v132
    %v393 = vunpack.c.l.b16 %v133
    %v394 = vunpack.c.l.b16 %v134
    %v395 = vunpack.c.l.b16 %v135
    %v396 = vunpack.c.l.b16 %v136
    %v397 = vunpack.c.l.b16 %v137
    %v398 = vunpack.c.l.b16 %v138
    %v399 = vunpack.c.l.b16 %v139
    %v400 = vunpack.c.l.b16 %v140
    %v401 = vunpack.c.l.b16 %v141
    %v402 = vunpack.c.l.b16 %v142
    %v403 = vunpack.c.l.b16 %v143
    %v404 = vunpack.c.l.b16 %v144
    %v405 = vunpack.c.l.b16 %v145
    %v406 = vunpack.c.l.b16 %v146
    %v407 = vunpack.c.l.b16 %v147
    %v408 = vunpack.c.l.b16 %v148
    %v409 = vunpack.c.l.b16 %v149
    %v410 = vunpack.c.l.b16 %v150
    %v411 = vunpack.c.l.b16 %v151
    %v412 = vunpack.c.l.b16 %v152
    %v413 = vunpack.c.l.b16 %v153
    %v414 = vunpack.c.l.b16 %v154
    %v415 = vunpack.c.l.b16 %v155
    %v416 = vunpack.c.l.b16 %v156
    %v417 = vunpack.c.l.b16 %v157
    %v418 = vunpack.c.l.b16 %v158
    %v419 = vunpack.c.l.b16 %v159
    %v420 = vunpack.c.l.b16 %v160
    %v421 = vunpack.c.l.b16 %v161
    %v422 = vunpack.c.l.b16 %v162
    %v423 = vunpack.c.l.b16 %v163
    %v424 = vunpack.c.l.b16 %v164
    %v425 = vunpack.c.l.b16 %v165
    %v426 = vunpack.c.l.b16 %v166
    %v427 = vunpack.c.l.b16 %v167
    %v428 = vunpack.c.l.b16 %v168
    %v429 = vunpack.c.l.b16 %v169
    %v430 = vunpack.c.l.b16 %v170
    %v431 = vunpack.c.l.b16 %v171
    %v432 = vunpack.c.l.b16 %v172
    %v433 = vunpack.c.l.b16 %v173
    %v434 = vunpack.c.l.b16 %v174
    %v435 = vunpack.c.l.b16 %v175
    %v436 = vunpack.c.l.b16 %v176
    %v437 = vunpack.c.l.b16 %v177
    %v438 = vunpack.c.l.b16 %v178
    %v439 = vunpack.c.l.b16 %v179
    %v440 = vunpack.c.l.b16 %v180
    %v441 = vunpack.c.l.b16 %v181
    %v442 = vunpack.c.l.b16 %v182
    %v443 = vunpack.c.l.b16 %v183
    %v444 = vunpack.c.l.b16 %v184
    %v445 = vunpack.c.l.b16 %v185
    %v446 = vunpack.c.l.b16 %v186
    %v447 = vunpack.c.l.b16 %v187
    %v448 = vunpack.c.l.b16 %v188
    %v449 = vunpack.c.l.b16 %v189
    %v450 = vunpack.c.l.b16 %v190
    %v451 = vunpack.c.l.b16 %v191
    %v452 = vunpack.c.l.b16 %v192
    %v453 = vunpack.c.l.b16 %v193
    %v454 = vunpack.c.l.b16 %v194
    %v455 = vunpack.c.l.b16 %v195
    %v456 = vunpack.c.l.b16 %v196
    %v457 = vunpack.c.l.b16 %v197
    %v458 = vunpack.c.l.b16 %v198
    %v459 = vpack.c.b16 %v332, %v331
    %v460 = vpack.c.b16 %v334, %v333
    %v461 = vpack.c.b16 %v336, %v335
    %v462 = vpack.c.b16 %v338, %v337
    %v463 = vpack.c.b16 %v340, %v339
    %v464 = vpack.c.b16 %v342, %v341
    %v465 = vpack.c.b16 %v344, %v343
    %v466 = vpack.c.b16 %v346, %v345
    %v467 = vpack.c.b16 %v348, %v347
    %v468 = vpack.c.b16 %v350, %v349
    %v469 = vpack.c.b16 %v352, %v351
    %v470 = vpack.c.b16 %v354, %v353
    %v471 = vpack.c.b16 %v356, %v355
    %v472 = vpack.c.b16 %v358, %v357
    %v473 = vpack.c.b16 %v360, %v359
    %v474 = vpack.c.b16 %v362, %v361
    %v475 = vpack.c.b16 %v364, %v363
    %v476 = vpack.c.b16 %v366, %v365
    %v477 = vpack.c.b16 %v368, %v367
    %v478 = vpack.c.b16 %v370, %v369
    %v479 = vpack.c.b16 %v372, %v371
    %v480 = vpack.c.b16 %v374, %v373
    %v481 = vpack.c.b16 %v376, %v375
    %v482 = vpack.c.b16 %v378, %v377
    %v483 = vpack.c.b16 %v380, %v379
    %v484 = vpack.c.b16 %v382, %v381
    %v485 = vpack.c.b16 %v384, %v383
    %v486 = vpack.c.b16 %v386, %v385
    %v487 = vpack.c.b16 %v388, %v387
    %v488 = vpack.c.b16 %v390, %v389
    %v489 = vpack.c.b16 %v392, %v391
    %v490 = vpack.c.b16 %v394, %v393
    %v491 = vpack.c.b16 %v396, %v395
    %v492 = vpack.c.b16 %v398, %v397
    %v493 = vpack.c.b16 %v400, %v399
    %v494 = vpack.c.b16 %v402, %v401
    %v495 = vpack.c.b16 %v404, %v403
    %v496 = vpack.c.b16 %v406, %v405
    %v497 = vpack.c.b16 %v408, %v407
    %v498 = vpack.c.b16 %v410, %v409
    %v499 = vpack.c.b16 %v412, %v411
    %v500 = vpack.c.b16 %v414, %v413
    %v501 = vpack.c.b16 %v416, %v415
    %v502 = vpack.c.b16 %v418, %v417
    %v503 = vpack.c.b16 %v420, %v419
    %v504 = vpack.c.b16 %v422, %v421
    %v505 = vpack.c.b16 %v424, %v423
    %v506 = vpack.c.b16 %v426, %v425
    %v507 = vpack.c.b16 %v428, %v427
    %v508 = vpack.c.b16 %v430, %v429
    %v509 = vpack.c.b16 %v432, %v431
    %v510 = vpack.c.b16 %v434, %v433
    %v511 = vpack.c.b16 %v436, %v435
    %v512 = vpack.c.b16 %v438, %v437
    %v513 = vpack.c.b16 %v440, %v439
    %v514 = vpack.c.b16 %v442, %v441
    %v515 = vpack.c.b16 %v444, %v443
    %v516 = vpack.c.b16 %v446, %v445
    %v517 = vpack.c.b16 %v448, %v447
    %v518 = vpack.c.b16 %v450, %v449
    %v519 = vpack.c.b16 %v452, %v451
    %v520 = vpack.c.b16 %v454, %v453
    %v521 = vpack.c.b16 %v456, %v455
    %v522 = vpack.c.b16 %v458, %v457
    %587 = vmatpush.bf16.msra.mxu0 %v466
    %588 = vmatpush.bf16.msra.mxu0 %v465
    %589 = vmatpush.bf16.msra.mxu0 %v464
    %590 = vmatpush.bf16.msra.mxu0 %v463
    %591 = vmatpush.bf16.msra.mxu0 %v462
    %592 = vmatpush.bf16.msra.mxu0 %v461
    %593 = vmatpush.bf16.msra.mxu0 %v460
    %594 = vmatpush.bf16.msra.mxu0 %v459
    %595 = vmatmul.bf16.gmra.mxu0 %v63
    %v596 = vpop.f32.mrf.mxu0
    %v597 = vadd.f32 %v201, %v596
    %v598 = vpop.f32.mrf.mxu0
    %v599 = vadd.f32 %v201, %v598
    %600 = vdwg.mxu0
    %601 = vmatpush.bf16.msra.mxu0 %v474
    %602 = vmatpush.bf16.msra.mxu0 %v473
    %603 = vmatpush.bf16.msra.mxu0 %v472
    %604 = vmatpush.bf16.msra.mxu0 %v471
    %605 = vmatpush.bf16.msra.mxu0 %v470
    %606 = vmatpush.bf16.msra.mxu0 %v469
    %607 = vmatpush.bf16.msra.mxu0 %v468
    %608 = vmatpush.bf16.msra.mxu0 %v467
    %609 = vmatmul.bf16.gmra.mxu0 %v64
    %v610 = vpop.f32.mrf.mxu0
    %v611 = vadd.f32 %v597, %v610
    %v612 = vpop.f32.mrf.mxu0
    %v613 = vadd.f32 %v599, %v612
    %614 = vdwg.mxu0
    %615 = vmatpush.bf16.msra.mxu0 %v482
    %616 = vmatpush.bf16.msra.mxu0 %v481
    %617 = vmatpush.bf16.msra.mxu0 %v480
    %618 = vmatpush.bf16.msra.mxu0 %v479
    %619 = vmatpush.bf16.msra.mxu0 %v478
    %620 = vmatpush.bf16.msra.mxu0 %v477
    %621 = vmatpush.bf16.msra.mxu0 %v476
    %622 = vmatpush.bf16.msra.mxu0 %v475
    %623 = vmatmul.bf16.gmra.mxu0 %v65
    %v624 = vpop.f32.mrf.mxu0
    %v625 = vadd.f32 %v611, %v624
    %v626 = vpop.f32.mrf.mxu0
    %v627 = vadd.f32 %v613, %v626
    %628 = vdwg.mxu0
    %629 = vmatpush.bf16.msra.mxu0 %v490
    %630 = vmatpush.bf16.msra.mxu0 %v489
    %631 = vmatpush.bf16.msra.mxu0 %v488
    %632 = vmatpush.bf16.msra.mxu0 %v487
    %633 = vmatpush.bf16.msra.mxu0 %v486
    %634 = vmatpush.bf16.msra.mxu0 %v485
    %635 = vmatpush.bf16.msra.mxu0 %v484
    %636 = vmatpush.bf16.msra.mxu0 %v483
    %637 = vmatmul.bf16.gmra.mxu0 %v66
    %v638 = vpop.f32.mrf.mxu0
    %v639 = vadd.f32 %v625, %v638
    %v640 = vpop.f32.mrf.mxu0
    %v641 = vadd.f32 %v627, %v640
    %642 = vdwg.mxu0
    %643 = vmatpush.bf16.msra.mxu0 %v498
    %644 = vmatpush.bf16.msra.mxu0 %v497
    %645 = vmatpush.bf16.msra.mxu0 %v496
    %646 = vmatpush.bf16.msra.mxu0 %v495
    %647 = vmatpush.bf16.msra.mxu0 %v494
    %648 = vmatpush.bf16.msra.mxu0 %v493
    %649 = vmatpush.bf16.msra.mxu0 %v492
    %650 = vmatpush.bf16.msra.mxu0 %v491
    %651 = vmatmul.bf16.gmra.mxu0 %v67
    %v652 = vpop.f32.mrf.mxu0
    %v653 = vadd.f32 %v639, %v652
    %v654 = vpop.f32.mrf.mxu0
    %v655 = vadd.f32 %v641, %v654
    %656 = vdwg.mxu0
    %657 = vmatpush.bf16.msra.mxu0 %v506
    %658 = vmatpush.bf16.msra.mxu0 %v505
    %659 = vmatpush.bf16.msra.mxu0 %v504
    %660 = vmatpush.bf16.msra.mxu0 %v503
    %661 = vmatpush.bf16.msra.mxu0 %v502
    %662 = vmatpush.bf16.msra.mxu0 %v501
    %663 = vmatpush.bf16.msra.mxu0 %v500
    %664 = vmatpush.bf16.msra.mxu0 %v499
    %665 = vmatmul.bf16.gmra.mxu0 %v68
    %v666 = vpop.f32.mrf.mxu0
    %v667 = vadd.f32 %v653, %v666
    %v668 = vpop.f32.mrf.mxu0
    %v669 = vadd.f32 %v655, %v668
    %670 = vdwg.mxu0
    %671 = vmatpush.bf16.msra.mxu0 %v514
    %672 = vmatpush.bf16.msra.mxu0 %v513
    %673 = vmatpush.bf16.msra.mxu0 %v512
    %674 = vmatpush.bf16.msra.mxu0 %v511
    %675 = vmatpush.bf16.msra.mxu0 %v510
    %676 = vmatpush.bf16.msra.mxu0 %v509
    %677 = vmatpush.bf16.msra.mxu0 %v508
    %678 = vmatpush.bf16.msra.mxu0 %v507
    %679 = vmatmul.bf16.gmra.mxu0 %v69
    %v680 = vpop.f32.mrf.mxu0
    %v681 = vadd.f32 %v667, %v680
    %v682 = vpop.f32.mrf.mxu0
    %v683 = vadd.f32 %v669, %v682
    %684 = vdwg.mxu0
    %685 = vmatpush.bf16.msra.mxu0 %v522
    %686 = vmatpush.bf16.msra.mxu0 %v521
    %687 = vmatpush.bf16.msra.mxu0 %v520
    %688 = vmatpush.bf16.msra.mxu0 %v519
    %689 = vmatpush.bf16.msra.mxu0 %v518
    %690 = vmatpush.bf16.msra.mxu0 %v517
    %691 = vmatpush.bf16.msra.mxu0 %v516
    %692 = vmatpush.bf16.msra.mxu0 %v515
    %693 = vmatmul.bf16.gmra.mxu0 %v70
    %v694 = vpop.f32.mrf.mxu0
    %v695 = vadd.f32 %v681, %v694
    %v696 = vpop.f32.mrf.mxu0
    %v697 = vadd.f32 %v683, %v696
    %698 = vdwg.mxu0
    %v699 = vmul.f32 %v695, %v695
    %v700 = vmul.f32 %v697, %v697
    %701 = vadd.xlane.f32.xlu0 %v699
    %v702 = vpop.xlane.xlu0 %701
    %703 = vadd.xlane.f32.xlu0 %v700
    %v704 = vpop.xlane.xlu0 %703
    %v705 = vmax.f32 %v702, 1e-24
    %v706 = vmax.f32 %v704, 1e-24
    %v707 = vrsqrt.pop %v705
    %v708 = vmul.f32 %v707, %v705
    %v709 = vmul.f32 %v708, %v707
    %v710 = vmul.f32 0.5, %v709
    %v711 = vsub.f32 1.5, %v710
    %v712 = vmul.f32 %v707, %v711
    %vm713 = vweird.f32 %v705
    %vm714 = vweird.f32 %v707
    %vm715 = vmor %vm713, %vm714
    %v716 = vsel %vm715, %v707, %v712
    %v717 = vrsqrt.pop %v706
    %v718 = vmul.f32 %v717, %v706
    %v719 = vmul.f32 %v718, %v717
    %v720 = vmul.f32 0.5, %v719
    %v721 = vsub.f32 1.5, %v720
    %v722 = vmul.f32 %v717, %v721
    %vm723 = vweird.f32 %v706
    %vm724 = vweird.f32 %v717
    %vm725 = vmor %vm723, %vm724
    %v726 = vsel %vm725, %v717, %v722
    %v727 = vmul.f32 %v695, %v716
    %v728 = vmul.f32 %v697, %v726
    %v729 = vpack.c.bf16 %v727, %v727
    %v730 = vpack.c.bf16 %v728, %v728
    %731 = vst [vmem:[#allocation7] sm:$0xf] %v729
    %732 = vst [vmem:[#allocation7 + $0x4] sm:$0xf] %v730
    // Predicated region
    $region22: #{tpu_custom_call.1} parent=1 // pred_check
      _
    $region23: #{tpu_custom_call.1} parent=1 // pred_check_branch
      %734 = sbr.rel (0) target = $region25
    $region24: #{tpu_custom_call.1} parent=1 // pred_region
      %736 = vsyncadd [#allocation4], 0
      %s737 = sshll.u32 [#allocation7], 4
      %s738 = int_to_ptr.vmem [resolvable:$true] %s737
      %s739 = sshll.u32 %s3, 4
      %s740 = int_to_ptr.hbm [resolvable:$true] %s739
      %745 = dma.vmem_to_hbm [thread:$0]  %s738, 128, %s740, [#allocation4], 64, 64, 4
    $region25: #{tpu_custom_call.1} parent=1 // pred_fallthru
      _
    // Predicated region
    $region26: #{tpu_custom_call.1} parent=1 // pred_check
      _
    $region27: #{tpu_custom_call.1} parent=1 // pred_check_branch
      %747 = sbr.rel (0) target = $region29
    $region28: #{tpu_custom_call.1} parent=1 // pred_region
      %749 = dma.done [#allocation4], 128
    $region29: #{tpu_custom_call.1} parent=1 // pred_fallthru
      _
    %750 = vsyncpa [#allocation3], 1
    %751 = vsyncpa [#allocation6], 1
    %752 = vsyncpa [#allocation4], 1

</llo_original>
